<compile_context>
chip_gen: v6e
topology: v6e:2x2x1
jax: 0.10.0
libtpu: 0.0.40
codegen_flags: <defaults>
</compile_context>

<pallas_src>
import jax
import jax.numpy as jnp
from jax.experimental import pallas as pl
from jax.experimental.pallas import tpu as pltpu

_PACK = 64  # batch rows packed per slab row -> 256 input lanes, 128 output lanes


def _enc_kernel(x_ref, w_ref, b_ref, o_ref):
    # x_ref: VMEM [TR, PACK*IN]        lane/sublane-dense input slab tile
    # w_ref: VMEM [PACK*IN, PACK*OUT]  block-diagonal 2*W^T (resident across grid)
    # b_ref: VMEM [1, PACK*OUT]        tiled 2*bias row
    # o_ref: VMEM [TR, PACK*OUT]       lane-dense output slab tile (unmasked stores)
    y = jnp.dot(
        x_ref[...], w_ref[...],
        preferred_element_type=jnp.float32,
        precision=jax.lax.Precision.HIGHEST,
    )
    o_ref[...] = (y + b_ref[...]).astype(o_ref.dtype)


def build_enc_params(w, b, pack=_PACK):
    """One-time parameter prep (NOT per call).

    Folds the e1+e2 factor of 2 and the block-diagonal slab layout into the params.
      w: [OUT, IN] (torch nn.Linear layout), b: [OUT]
      -> wblk [pack*IN, pack*OUT]  block-diagonal with 2*W^T blocks
         bias_row [1, pack*OUT]    tiled 2*b
    """
    out_dim, _ = w.shape
    wblk = jnp.kron(jnp.eye(pack, dtype=jnp.float32), (2.0 * w).T.astype(jnp.float32))
    bias_row = jnp.tile((2.0 * b).astype(jnp.float32).reshape(1, out_dim), (1, pack))
    return wblk, bias_row


def enc_forward(x, wblk, bias_row, *, max_tile_rows=2048, pack=_PACK):
    """x: [B, IN] f32 -> [B, OUT] f32, computing 2*(x @ W.T + b) with one MXU matmul per tile."""
    B, in_dim = x.shape
    lanes_in = pack * in_dim
    lanes_out = bias_row.shape[1]
    out_dim = lanes_out // pack
    assert wblk.shape == (lanes_in, lanes_out)

    # Slab geometry: one slab row packs `pack` batch rows; tiles are `tr` slab rows
    # (sublane-aligned).  tr=2048 -> ~3 MiB HBM traffic / step, ~6.3 MiB VMEM
    # double-buffered: inside default scoped VMEM on v5e/v6e/v7x.
    rows_needed = pl.cdiv(B, pack)
    tr = min(max_tile_rows, pl.cdiv(rows_needed, 8) * 8)
    slab_rows = pl.cdiv(rows_needed, tr) * tr
    Bp = slab_rows * pack
    grid = (slab_rows // tr,)

    # Pad only when the batch is not slab-aligned (aligned batches pay zero extra
    # HBM passes); the reshape itself is free (contiguous, row-major).
    xp = x if Bp == B else jnp.zeros((Bp, in_dim), x.dtype).at[:B].set(x)
    x_slab = xp.reshape(slab_rows, lanes_in)

    cost = pl.CostEstimate(
        flops=2 * Bp * in_dim * out_dim,
        transcendentals=0,
        bytes_accessed=Bp * (in_dim + out_dim) * 4 + (wblk.size + bias_row.size) * 4,
    )

    out_slab = pl.pallas_call(
        _enc_kernel,
        out_shape=jax.ShapeDtypeStruct((slab_rows, lanes_out), x.dtype),
        grid=grid,
        in_specs=[
            pl.BlockSpec((tr, lanes_in), lambda i: (i, 0)),         # x slab tile
            pl.BlockSpec((lanes_in, lanes_out), lambda i: (0, 0)),  # block-diag weights
            pl.BlockSpec((1, lanes_out), lambda i: (0, 0)),         # tiled bias row
        ],
        out_specs=pl.BlockSpec((tr, lanes_out), lambda i: (i, 0)),
        compiler_params=pltpu.CompilerParams(
            dimension_semantics=("parallel",),
        ),
        cost_estimate=cost,
    )(x_slab, wblk, bias_row)

    # Free reshape back to the natural [B, OUT] layout; slice only if we padded.
    out = out_slab.reshape(Bp, out_dim)
    return out if Bp == B else out[:B]


def _ref_forward(x, w, b):
    # Pure-JAX reference of _Enc.forward (torch layout W:[OUT,IN], b:[OUT]).
    y = x @ w.T + b
    return y + y


if __name__ == "__main__":
    key = jax.random.PRNGKey(0)
    k_x, k_w, k_b, k_x2 = jax.random.split(key, 4)

    B, IN, OUT = 8, 4, 2  # nn.Linear(4, 2)

    x = jax.random.normal(k_x, (B, IN), dtype=jnp.float32)
    # Deterministic synthetic "parameter init" (torch layout: W [OUT, IN], b [OUT]).
    w = jax.random.uniform(k_w, (OUT, IN), dtype=jnp.float32, minval=-0.5, maxval=0.5)
    b = jax.random.uniform(k_b, (OUT,), dtype=jnp.float32, minval=-0.5, maxval=0.5)

    # One-time parameter prep: fold the factor of 2 + build block-diagonal slab.
    wblk, bias_row = build_enc_params(w, b)

    # Small batch.
    out = enc_forward(x, wblk, bias_row)
    jax.block_until_ready(out)
    ref = _ref_forward(x, w, b)
    assert out.shape == (B, OUT)
    assert jnp.allclose(out, ref, atol=1e-4, rtol=1e-4)

    # Larger, non-aligned batch (exercises padding + single large tile).
    B2 = 1000
    x2 = jax.random.normal(k_x2, (B2, IN), dtype=jnp.float32)
    out2 = enc_forward(x2, wblk, bias_row)
    jax.block_until_ready(out2)
    ref2 = _ref_forward(x2, w, b)
    assert out2.shape == (B2, OUT)
    assert jnp.allclose(out2, ref2, atol=1e-4, rtol=1e-4)

    # Same batch with a tiny tile to exercise a multi-step (grid > 1) pipeline.
    out3 = enc_forward(x2, wblk, bias_row, max_tile_rows=8)
    jax.block_until_ready(out3)
    assert jnp.allclose(out3, ref2, atol=1e-4, rtol=1e-4)

    print("KERNEL_OK")
</pallas_src>

<mosaic_0001>
module attributes {stable_mosaic.version = 11 : i64} {
  func.func @_enc_kernel(%arg0: i32, %arg1: memref<8x256xf32, #tpu.memory_space<vmem>>, %arg2: memref<256x128xf32, #tpu.memory_space<vmem>>, %arg3: memref<1x128xf32, #tpu.memory_space<vmem>>, %arg4: memref<8x128xf32, #tpu.memory_space<vmem>>) attributes {dimension_semantics = [#tpu.dimension_semantics<parallel>], iteration_bounds = array<i64: 1>, scalar_prefetch = 0 : i64, scratch_operands = 0 : i64, tpu.core_type = #tpu.core_type<tc>, window_params = [{transform_indices = @transform_0, window_bounds = array<i64: 8, 256>}, {pipeline_mode = #tpu.pipeline_mode<synchronous>, transform_indices = @transform_1, window_bounds = array<i64: 256, 128>}, {pipeline_mode = #tpu.pipeline_mode<synchronous>, transform_indices = @transform_2, window_bounds = array<i64: 1, 128>}, {transform_indices = @transform_3, window_bounds = array<i64: 8, 128>}]} {
    %c0 = arith.constant 0 : index
    %c0_0 = arith.constant 0 : index
    %0 = vector.load %arg1[%c0, %c0_0] : memref<8x256xf32, #tpu.memory_space<vmem>>, vector<8x256xf32>
    %c0_1 = arith.constant 0 : index
    %c0_2 = arith.constant 0 : index
    %1 = vector.load %arg2[%c0_1, %c0_2] : memref<256x128xf32, #tpu.memory_space<vmem>>, vector<256x128xf32>
    %cst = arith.constant dense<0.000000e+00> : vector<8x128xf32>
    %2 = tpu.matmul %0, %1, %cst {dimension_numbers = #tpu.dot_dimension_numbers<[1], [0], [0], [1], [0, 0, 1, 1], [], []>, precision = #tpu.contract_precision<fp32>} : vector<8x256xf32>, vector<256x128xf32>, vector<8x128xf32> -> vector<8x128xf32>
    %c0_3 = arith.constant 0 : index
    %c0_4 = arith.constant 0 : index
    %3 = vector.load %arg3[%c0_3, %c0_4] : memref<1x128xf32, #tpu.memory_space<vmem>>, vector<1x128xf32>
    %4 = vector.broadcast %3 : vector<1x128xf32> to vector<8x128xf32>
    %5 = arith.addf %2, %4 : vector<8x128xf32>
    %c0_5 = arith.constant 0 : index
    %c0_6 = arith.constant 0 : index
    %6 = vector.load %arg4[%c0_5, %c0_6] : memref<8x128xf32, #tpu.memory_space<vmem>>, vector<8x128xf32>
    tpu.vector_store %arg4[%c0_5, %c0_6], %5 {strides = array<i32>} : memref<8x128xf32, #tpu.memory_space<vmem>>, vector<8x128xf32>,
    return
  }
  func.func @transform_0(%arg0: i32) -> (i32, i32) {
    %c0_i32 = arith.constant 0 : i32
    %c0_i32_0 = arith.constant 0 : i32
    return %arg0, %c0_i32 : i32, i32
  }
  func.func @transform_1(%arg0: i32) -> (i32, i32) {
    %c0_i32 = arith.constant 0 : i32
    %c0_i32_0 = arith.constant 0 : i32
    %c0_i32_1 = arith.constant 0 : i32
    return %c0_i32, %c0_i32_0 : i32, i32
  }
  func.func @transform_2(%arg0: i32) -> (i32, i32) {
    %c0_i32 = arith.constant 0 : i32
    %c0_i32_0 = arith.constant 0 : i32
    %c0_i32_1 = arith.constant 0 : i32
    return %c0_i32, %c0_i32_0 : i32, i32
  }
  func.func @transform_3(%arg0: i32) -> (i32, i32) {
    %c0_i32 = arith.constant 0 : i32
    %c0_i32_0 = arith.constant 0 : i32
    return %arg0, %c0_i32 : i32, i32
  }
}

</mosaic_0001>

<llo_original>
// kernel: tpu_custom_call.1
$region0: #{tpu_custom_call.1}
  #allocation0 [shape = 'u32[]', space=smem, size = 0x4, offset = 0x4, fixed_abs, tag = 'smem constant byte address 0x4 - core index']
  #allocation1 [shape = 'u32[144,128]{1,0:T(1,128)}', space=vmem, size = 0x12000, scoped, tag = 'internal scratch']
  %s0 = inlined_call_operand.hbm [shape: f32[8,256], index: 0, kind: input, shape index: {}]
  %s1 = inlined_call_operand.hbm [shape: f32[256,128], index: 1, kind: input, shape index: {}]
  %s2 = inlined_call_operand.vmem [shape: f32[1,128], index: 2, kind: input, shape index: {}]
  %s3 = inlined_call_operand.hbm [shape: f32[8,128], index: 3, kind: output, shape index: {}]
  %s4 = sld [smem:[#allocation0]]
  $region30: #{tpu_custom_call.1} parent=0
    _
  %s6 = ssub.s32 1, %s4
  %s7 = scalar_select 0, %s6, %s4
  $region1: #{tpu_custom_call.1} parent=0
    #allocation2 [shape = 'u8[8192]{0}', space=vmem, size = 0x2000, scoped, tag = 'input window, operand 0, single buffered']
    #allocation3 [shape = 's32[1]{0}', space=sflag, size = 0x4, scoped, tag = 'scoped memory for tpu_custom_call.1']
    #allocation4 [shape = 's32[1]{0}', space=sflag, size = 0x4, scoped, tag = 'scoped memory for tpu_custom_call.1']
    #allocation5 [shape = 'u8[131072]{0}', space=vmem, size = 0x20000, scoped, tag = 'input window, operand 1, single buffered']
    #allocation6 [shape = 's32[1]{0}', space=sflag, size = 0x4, scoped, tag = 'scoped memory for tpu_custom_call.1']
    #allocation7 [shape = 'u8[4096]{0}', space=vmem, size = 0x1000, scoped, tag = 'output window, operand 0, single buffered']
    %8 = vsyncpa [#allocation3], 0
    %9 = vsyncpa [#allocation6], 0
    %10 = vsyncpa [#allocation4], 0
    // Predicated region
    $region2: #{tpu_custom_call.1} parent=1 // pred_check
      _
    $region3: #{tpu_custom_call.1} parent=1 // pred_check_branch
      %12 = sbr.rel (0) target = $region5
    $region4: #{tpu_custom_call.1} parent=1 // pred_region
      %s14 = ssub.s32 256, 256
      %15 = vsyncadd [#allocation3], %s14
      %s17 = sshll.u32 [#allocation2], 4
      %s18 = int_to_ptr.vmem [resolvable:$true] %s17
      %20 = dma.hbm_to_vmem [thread:$0]  %s0, 256, %s18, [#allocation3]
    $region5: #{tpu_custom_call.1} parent=1 // pred_fallthru
      _
    // Predicated region
    $region6: #{tpu_custom_call.1} parent=1 // pred_check
      _
    $region7: #{tpu_custom_call.1} parent=1 // pred_check_branch
      %22 = sbr.rel (0) target = $region9
    $region8: #{tpu_custom_call.1} parent=1 // pred_region
      %s24 = ssub.s32 4096, 4096
      %25 = vsyncadd [#allocation6], %s24
      %s26 = sshll.u32 [#allocation5], 4
      %s27 = int_to_ptr.vmem [resolvable:$true] %s26
      %32 = dma.hbm_to_vmem [thread:$0]  %s1, 4096, %s27, [#allocation6], 128, 128, 8
    $region9: #{tpu_custom_call.1} parent=1 // pred_fallthru
      _
    // Predicated region
    $region10: #{tpu_custom_call.1} parent=1 // pred_check
      _
    $region11: #{tpu_custom_call.1} parent=1 // pred_check_branch
      %34 = sbr.rel (0) target = $region13
    $region12: #{tpu_custom_call.1} parent=1 // pred_region
      _
    $region13: #{tpu_custom_call.1} parent=1 // pred_fallthru
      _
    // Predicated region
    $region14: #{tpu_custom_call.1} parent=1 // pred_check
      _
    $region15: #{tpu_custom_call.1} parent=1 // pred_check_branch
      %36 = sbr.rel (0) target = $region17
    $region16: #{tpu_custom_call.1} parent=1 // pred_region
      %37 = dma.done [#allocation3], 256
    $region17: #{tpu_custom_call.1} parent=1 // pred_fallthru
      _
    // Predicated region
    $region18: #{tpu_custom_call.1} parent=1 // pred_check
      _
    $region19: #{tpu_custom_call.1} parent=1 // pred_check_branch
      %39 = sbr.rel (0) target = $region21
    $region20: #{tpu_custom_call.1} parent=1 // pred_region
      %40 = dma.done [#allocation6], 4096
    $region21: #{tpu_custom_call.1} parent=1 // pred_fallthru
      _
    %v41 = vld [vmem:[#allocation2] sm:$0xff]
    %v42 = vld [vmem:[#allocation2 + $0x8] sm:$0xff]
    %v43 = vld [vmem:[#allocation5] sm:$0xff]
    %v44 = vld [vmem:[#allocation5 + $0x8] sm:$0xff]
    %v45 = vld [vmem:[#allocation5 + $0x10] sm:$0xff]
    %v46 = vld [vmem:[#allocation5 + $0x18] sm:$0xff]
    %v47 = vld [vmem:[#allocation5 + $0x20] sm:$0xff]
    %v48 = vld [vmem:[#allocation5 + $0x28] sm:$0xff]
    %v49 = vld [vmem:[#allocation5 + $0x30] sm:$0xff]
    %v50 = vld [vmem:[#allocation5 + $0x38] sm:$0xff]
    %v51 = vld [vmem:[#allocation5 + $0x40] sm:$0xff]
    %v52 = vld [vmem:[#allocation5 + $0x48] sm:$0xff]
    %v53 = vld [vmem:[#allocation5 + $0x50] sm:$0xff]
    %v54 = vld [vmem:[#allocation5 + $0x58] sm:$0xff]
    %v55 = vld [vmem:[#allocation5 + $0x60] sm:$0xff]
    %v56 = vld [vmem:[#allocation5 + $0x68] sm:$0xff]
    %v57 = vld [vmem:[#allocation5 + $0x70] sm:$0xff]
    %v58 = vld [vmem:[#allocation5 + $0x78] sm:$0xff]
    %v59 = vld [vmem:[#allocation5 + $0x80] sm:$0xff]
    %v60 = vld [vmem:[#allocation5 + $0x88] sm:$0xff]
    %v61 = vld [vmem:[#allocation5 + $0x90] sm:$0xff]
    %v62 = vld [vmem:[#allocation5 + $0x98] sm:$0xff]
    %v63 = vld [vmem:[#allocation5 + $0xa0] sm:$0xff]
    %v64 = vld [vmem:[#allocation5 + $0xa8] sm:$0xff]
    %v65 = vld [vmem:[#allocation5 + $0xb0] sm:$0xff]
    %v66 = vld [vmem:[#allocation5 + $0xb8] sm:$0xff]
    %v67 = vld [vmem:[#allocation5 + $0xc0] sm:$0xff]
    %v68 = vld [vmem:[#allocation5 + $0xc8] sm:$0xff]
    %v69 = vld [vmem:[#allocation5 + $0xd0] sm:$0xff]
    %v70 = vld [vmem:[#allocation5 + $0xd8] sm:$0xff]
    %v71 = vld [vmem:[#allocation5 + $0xe0] sm:$0xff]
    %v72 = vld [vmem:[#allocation5 + $0xe8] sm:$0xff]
    %v73 = vld [vmem:[#allocation5 + $0xf0] sm:$0xff]
    %v74 = vld [vmem:[#allocation5 + $0xf8] sm:$0xff]
    %v75 = vld [vmem:[%s2] sm:$0x1]
    %v77 = vlaneseq
    %v78 = vshrl.u32 %v77, 7
    %v79 = vsub.s32 0, %v78
    %v80 = vrot.slane %v75, %v79
    %82 = vmatprep.subr.mxu0 0.0
    %v83 = vand.u32 %v58, 4294901760
    %84 = vmatpush1.msra.mxu0 %v83
    %85 = vmatprep.subr.mxu0 0.0
    %v86 = vand.u32 %v57, 4294901760
    %87 = vmatpush1.msra.mxu0 %v86
    %88 = vmatprep.subr.mxu0 0.0
    %v89 = vand.u32 %v56, 4294901760
    %90 = vmatpush1.msra.mxu0 %v89
    %91 = vmatprep.subr.mxu0 0.0
    %v92 = vand.u32 %v55, 4294901760
    %93 = vmatpush1.msra.mxu0 %v92
    %94 = vmatprep.subr.mxu0 0.0
    %v95 = vand.u32 %v54, 4294901760
    %96 = vmatpush1.msra.mxu0 %v95
    %97 = vmatprep.subr.mxu0 0.0
    %v98 = vand.u32 %v53, 4294901760
    %99 = vmatpush1.msra.mxu0 %v98
    %100 = vmatprep.subr.mxu0 0.0
    %v101 = vand.u32 %v52, 4294901760
    %102 = vmatpush1.msra.mxu0 %v101
    %103 = vmatprep.subr.mxu0 0.0
    %v104 = vand.u32 %v51, 4294901760
    %105 = vmatpush1.msra.mxu0 %v104
    %106 = vmatprep.subr.mxu0 0.0
    %v107 = vand.u32 %v50, 4294901760
    %108 = vmatpush1.msra.mxu0 %v107
    %109 = vmatprep.subr.mxu0 0.0
    %v110 = vand.u32 %v49, 4294901760
    %111 = vmatpush1.msra.mxu0 %v110
    %112 = vmatprep.subr.mxu0 0.0
    %v113 = vand.u32 %v48, 4294901760
    %114 = vmatpush1.msra.mxu0 %v113
    %115 = vmatprep.subr.mxu0 0.0
    %v116 = vand.u32 %v47, 4294901760
    %117 = vmatpush1.msra.mxu0 %v116
    %118 = vmatprep.subr.mxu0 0.0
    %v119 = vand.u32 %v46, 4294901760
    %120 = vmatpush1.msra.mxu0 %v119
    %121 = vmatprep.subr.mxu0 0.0
    %v122 = vand.u32 %v45, 4294901760
    %123 = vmatpush1.msra.mxu0 %v122
    %124 = vmatprep.subr.mxu0 0.0
    %v125 = vand.u32 %v44, 4294901760
    %126 = vmatpush1.msra.mxu0 %v125
    %127 = vmatprep.subr.mxu0 0.0
    %v128 = vand.u32 %v43, 4294901760
    %129 = vmatpush1.msra.mxu0 %v128
    %130 = vmatprep.subr.mxu0 0.0
    %v131 = vand.u32 %v74, 4294901760
    %132 = vmatpush2.msra.mxu0 %v131
    %133 = vmatprep.subr.mxu0 0.0
    %v134 = vand.u32 %v73, 4294901760
    %135 = vmatpush2.msra.mxu0 %v134
    %136 = vmatprep.subr.mxu0 0.0
    %v137 = vand.u32 %v72, 4294901760
    %138 = vmatpush2.msra.mxu0 %v137
    %139 = vmatprep.subr.mxu0 0.0
    %v140 = vand.u32 %v71, 4294901760
    %141 = vmatpush2.msra.mxu0 %v140
    %142 = vmatprep.subr.mxu0 0.0
    %v143 = vand.u32 %v70, 4294901760
    %144 = vmatpush2.msra.mxu0 %v143
    %145 = vmatprep.subr.mxu0 0.0
    %v146 = vand.u32 %v69, 4294901760
    %147 = vmatpush2.msra.mxu0 %v146
    %148 = vmatprep.subr.mxu0 0.0
    %v149 = vand.u32 %v68, 4294901760
    %150 = vmatpush2.msra.mxu0 %v149
    %151 = vmatprep.subr.mxu0 0.0
    %v152 = vand.u32 %v67, 4294901760
    %153 = vmatpush2.msra.mxu0 %v152
    %154 = vmatprep.subr.mxu0 0.0
    %v155 = vand.u32 %v66, 4294901760
    %156 = vmatpush2.msra.mxu0 %v155
    %157 = vmatprep.subr.mxu0 0.0
    %v158 = vand.u32 %v65, 4294901760
    %159 = vmatpush2.msra.mxu0 %v158
    %160 = vmatprep.subr.mxu0 0.0
    %v161 = vand.u32 %v64, 4294901760
    %162 = vmatpush2.msra.mxu0 %v161
    %163 = vmatprep.subr.mxu0 0.0
    %v164 = vand.u32 %v63, 4294901760
    %165 = vmatpush2.msra.mxu0 %v164
    %166 = vmatprep.subr.mxu0 0.0
    %v167 = vand.u32 %v62, 4294901760
    %168 = vmatpush2.msra.mxu0 %v167
    %169 = vmatprep.subr.mxu0 0.0
    %v170 = vand.u32 %v61, 4294901760
    %171 = vmatpush2.msra.mxu0 %v170
    %172 = vmatprep.subr.mxu0 0.0
    %v173 = vand.u32 %v60, 4294901760
    %174 = vmatpush2.msra.mxu0 %v173
    %175 = vmatprep.subr.mxu0 0.0
    %v176 = vand.u32 %v59, 4294901760
    %177 = vmatpush2.msra.mxu0 %v176
    %v178 = vand.u32 %v42, 4294901760
    %v179 = vsub.f32 %v42, %v178
    %v180 = vand.u32 %v179, 4294901760
    %v181 = vsub.f32 %v179, %v180
    %v182 = vand.u32 %v181, 4294901760
    %183 = vmatprep.mubr.f32.mxu0 %v182
    %v184 = vand.u32 %v41, 4294901760
    %v185 = vsub.f32 %v41, %v184
    %v186 = vand.u32 %v185, 4294901760
    %v187 = vsub.f32 %v185, %v186
    %v188 = vand.u32 %v187, 4294901760
    %189 = vmatmul.mubr.f32.gmra.mxu0 %v188
    %v190 = vpop.f32.mrf.mxu0
    %v191 = vadd.f32 %v80, %v190
    %v192 = vpop.f32.mrf.mxu0
    %193 = vdwg.mxu0
    %194 = vmatprep.subr.mxu0 0.0
    %v195 = vand.u32 %v58, 4294901760
    %v196 = vsub.f32 %v58, %v195
    %v197 = vand.u32 %v196, 4294901760
    %v198 = vsub.f32 %v196, %v197
    %v199 = vand.u32 %v198, 4294901760
    %200 = vmatpush1.msra.mxu0 %v199
    %201 = vmatprep.subr.mxu0 0.0
    %v202 = vand.u32 %v57, 4294901760
    %v203 = vsub.f32 %v57, %v202
    %v204 = vand.u32 %v203, 4294901760
    %v205 = vsub.f32 %v203, %v204
    %v206 = vand.u32 %v205, 4294901760
    %207 = vmatpush1.msra.mxu0 %v206
    %208 = vmatprep.subr.mxu0 0.0
    %v209 = vand.u32 %v56, 4294901760
    %v210 = vsub.f32 %v56, %v209
    %v211 = vand.u32 %v210, 4294901760
    %v212 = vsub.f32 %v210, %v211
    %v213 = vand.u32 %v212, 4294901760
    %214 = vmatpush1.msra.mxu0 %v213
    %215 = vmatprep.subr.mxu0 0.0
    %v216 = vand.u32 %v55, 4294901760
    %v217 = vsub.f32 %v55, %v216
    %v218 = vand.u32 %v217, 4294901760
    %v219 = vsub.f32 %v217, %v218
    %v220 = vand.u32 %v219, 4294901760
    %221 = vmatpush1.msra.mxu0 %v220
    %222 = vmatprep.subr.mxu0 0.0
    %v223 = vand.u32 %v54, 4294901760
    %v224 = vsub.f32 %v54, %v223
    %v225 = vand.u32 %v224, 4294901760
    %v226 = vsub.f32 %v224, %v225
    %v227 = vand.u32 %v226, 4294901760
    %228 = vmatpush1.msra.mxu0 %v227
    %229 = vmatprep.subr.mxu0 0.0
    %v230 = vand.u32 %v53, 4294901760
    %v231 = vsub.f32 %v53, %v230
    %v232 = vand.u32 %v231, 4294901760
    %v233 = vsub.f32 %v231, %v232
    %v234 = vand.u32 %v233, 4294901760
    %235 = vmatpush1.msra.mxu0 %v234
    %236 = vmatprep.subr.mxu0 0.0
    %v237 = vand.u32 %v52, 4294901760
    %v238 = vsub.f32 %v52, %v237
    %v239 = vand.u32 %v238, 4294901760
    %v240 = vsub.f32 %v238, %v239
    %v241 = vand.u32 %v240, 4294901760
    %242 = vmatpush1.msra.mxu0 %v241
    %243 = vmatprep.subr.mxu0 0.0
    %v244 = vand.u32 %v51, 4294901760
    %v245 = vsub.f32 %v51, %v244
    %v246 = vand.u32 %v245, 4294901760
    %v247 = vsub.f32 %v245, %v246
    %v248 = vand.u32 %v247, 4294901760
    %249 = vmatpush1.msra.mxu0 %v248
    %250 = vmatprep.subr.mxu0 0.0
    %v251 = vand.u32 %v50, 4294901760
    %v252 = vsub.f32 %v50, %v251
    %v253 = vand.u32 %v252, 4294901760
    %v254 = vsub.f32 %v252, %v253
    %v255 = vand.u32 %v254, 4294901760
    %256 = vmatpush1.msra.mxu0 %v255
    %257 = vmatprep.subr.mxu0 0.0
    %v258 = vand.u32 %v49, 4294901760
    %v259 = vsub.f32 %v49, %v258
    %v260 = vand.u32 %v259, 4294901760
    %v261 = vsub.f32 %v259, %v260
    %v262 = vand.u32 %v261, 4294901760
    %263 = vmatpush1.msra.mxu0 %v262
    %264 = vmatprep.subr.mxu0 0.0
    %v265 = vand.u32 %v48, 4294901760
    %v266 = vsub.f32 %v48, %v265
    %v267 = vand.u32 %v266, 4294901760
    %v268 = vsub.f32 %v266, %v267
    %v269 = vand.u32 %v268, 4294901760
    %270 = vmatpush1.msra.mxu0 %v269
    %271 = vmatprep.subr.mxu0 0.0
    %v272 = vand.u32 %v47, 4294901760
    %v273 = vsub.f32 %v47, %v272
    %v274 = vand.u32 %v273, 4294901760
    %v275 = vsub.f32 %v273, %v274
    %v276 = vand.u32 %v275, 4294901760
    %277 = vmatpush1.msra.mxu0 %v276
    %278 = vmatprep.subr.mxu0 0.0
    %v279 = vand.u32 %v46, 4294901760
    %v280 = vsub.f32 %v46, %v279
    %v281 = vand.u32 %v280, 4294901760
    %v282 = vsub.f32 %v280, %v281
    %v283 = vand.u32 %v282, 4294901760
    %284 = vmatpush1.msra.mxu0 %v283
    %285 = vmatprep.subr.mxu0 0.0
    %v286 = vand.u32 %v45, 4294901760
    %v287 = vsub.f32 %v45, %v286
    %v288 = vand.u32 %v287, 4294901760
    %v289 = vsub.f32 %v287, %v288
    %v290 = vand.u32 %v289, 4294901760
    %291 = vmatpush1.msra.mxu0 %v290
    %292 = vmatprep.subr.mxu0 0.0
    %v293 = vand.u32 %v44, 4294901760
    %v294 = vsub.f32 %v44, %v293
    %v295 = vand.u32 %v294, 4294901760
    %v296 = vsub.f32 %v294, %v295
    %v297 = vand.u32 %v296, 4294901760
    %298 = vmatpush1.msra.mxu0 %v297
    %299 = vmatprep.subr.mxu0 0.0
    %v300 = vand.u32 %v43, 4294901760
    %v301 = vsub.f32 %v43, %v300
    %v302 = vand.u32 %v301, 4294901760
    %v303 = vsub.f32 %v301, %v302
    %v304 = vand.u32 %v303, 4294901760
    %305 = vmatpush1.msra.mxu0 %v304
    %306 = vmatprep.subr.mxu0 0.0
    %v307 = vand.u32 %v74, 4294901760
    %v308 = vsub.f32 %v74, %v307
    %v309 = vand.u32 %v308, 4294901760
    %v310 = vsub.f32 %v308, %v309
    %v311 = vand.u32 %v310, 4294901760
    %312 = vmatpush2.msra.mxu0 %v311
    %313 = vmatprep.subr.mxu0 0.0
    %v314 = vand.u32 %v73, 4294901760
    %v315 = vsub.f32 %v73, %v314
    %v316 = vand.u32 %v315, 4294901760
    %v317 = vsub.f32 %v315, %v316
    %v318 = vand.u32 %v317, 4294901760
    %319 = vmatpush2.msra.mxu0 %v318
    %320 = vmatprep.subr.mxu0 0.0
    %v321 = vand.u32 %v72, 4294901760
    %v322 = vsub.f32 %v72, %v321
    %v323 = vand.u32 %v322, 4294901760
    %v324 = vsub.f32 %v322, %v323
    %v325 = vand.u32 %v324, 4294901760
    %326 = vmatpush2.msra.mxu0 %v325
    %327 = vmatprep.subr.mxu0 0.0
    %v328 = vand.u32 %v71, 4294901760
    %v329 = vsub.f32 %v71, %v328
    %v330 = vand.u32 %v329, 4294901760
    %v331 = vsub.f32 %v329, %v330
    %v332 = vand.u32 %v331, 4294901760
    %333 = vmatpush2.msra.mxu0 %v332
    %334 = vmatprep.subr.mxu0 0.0
    %v335 = vand.u32 %v70, 4294901760
    %v336 = vsub.f32 %v70, %v335
    %v337 = vand.u32 %v336, 4294901760
    %v338 = vsub.f32 %v336, %v337
    %v339 = vand.u32 %v338, 4294901760
    %340 = vmatpush2.msra.mxu0 %v339
    %341 = vmatprep.subr.mxu0 0.0
    %v342 = vand.u32 %v69, 4294901760
    %v343 = vsub.f32 %v69, %v342
    %v344 = vand.u32 %v343, 4294901760
    %v345 = vsub.f32 %v343, %v344
    %v346 = vand.u32 %v345, 4294901760
    %347 = vmatpush2.msra.mxu0 %v346
    %348 = vmatprep.subr.mxu0 0.0
    %v349 = vand.u32 %v68, 4294901760
    %v350 = vsub.f32 %v68, %v349
    %v351 = vand.u32 %v350, 4294901760
    %v352 = vsub.f32 %v350, %v351
    %v353 = vand.u32 %v352, 4294901760
    %354 = vmatpush2.msra.mxu0 %v353
    %355 = vmatprep.subr.mxu0 0.0
    %v356 = vand.u32 %v67, 4294901760
    %v357 = vsub.f32 %v67, %v356
    %v358 = vand.u32 %v357, 4294901760
    %v359 = vsub.f32 %v357, %v358
    %v360 = vand.u32 %v359, 4294901760
    %361 = vmatpush2.msra.mxu0 %v360
    %362 = vmatprep.subr.mxu0 0.0
    %v363 = vand.u32 %v66, 4294901760
    %v364 = vsub.f32 %v66, %v363
    %v365 = vand.u32 %v364, 4294901760
    %v366 = vsub.f32 %v364, %v365
    %v367 = vand.u32 %v366, 4294901760
    %368 = vmatpush2.msra.mxu0 %v367
    %369 = vmatprep.subr.mxu0 0.0
    %v370 = vand.u32 %v65, 4294901760
    %v371 = vsub.f32 %v65, %v370
    %v372 = vand.u32 %v371, 4294901760
    %v373 = vsub.f32 %v371, %v372
    %v374 = vand.u32 %v373, 4294901760
    %375 = vmatpush2.msra.mxu0 %v374
    %376 = vmatprep.subr.mxu0 0.0
    %v377 = vand.u32 %v64, 4294901760
    %v378 = vsub.f32 %v64, %v377
    %v379 = vand.u32 %v378, 4294901760
    %v380 = vsub.f32 %v378, %v379
    %v381 = vand.u32 %v380, 4294901760
    %382 = vmatpush2.msra.mxu0 %v381
    %383 = vmatprep.subr.mxu0 0.0
    %v384 = vand.u32 %v63, 4294901760
    %v385 = vsub.f32 %v63, %v384
    %v386 = vand.u32 %v385, 4294901760
    %v387 = vsub.f32 %v385, %v386
    %v388 = vand.u32 %v387, 4294901760
    %389 = vmatpush2.msra.mxu0 %v388
    %390 = vmatprep.subr.mxu0 0.0
    %v391 = vand.u32 %v62, 4294901760
    %v392 = vsub.f32 %v62, %v391
    %v393 = vand.u32 %v392, 4294901760
    %v394 = vsub.f32 %v392, %v393
    %v395 = vand.u32 %v394, 4294901760
    %396 = vmatpush2.msra.mxu0 %v395
    %397 = vmatprep.subr.mxu0 0.0
    %v398 = vand.u32 %v61, 4294901760
    %v399 = vsub.f32 %v61, %v398
    %v400 = vand.u32 %v399, 4294901760
    %v401 = vsub.f32 %v399, %v400
    %v402 = vand.u32 %v401, 4294901760
    %403 = vmatpush2.msra.mxu0 %v402
    %404 = vmatprep.subr.mxu0 0.0
    %v405 = vand.u32 %v60, 4294901760
    %v406 = vsub.f32 %v60, %v405
    %v407 = vand.u32 %v406, 4294901760
    %v408 = vsub.f32 %v406, %v407
    %v409 = vand.u32 %v408, 4294901760
    %410 = vmatpush2.msra.mxu0 %v409
    %411 = vmatprep.subr.mxu0 0.0
    %v412 = vand.u32 %v59, 4294901760
    %v413 = vsub.f32 %v59, %v412
    %v414 = vand.u32 %v413, 4294901760
    %v415 = vsub.f32 %v413, %v414
    %v416 = vand.u32 %v415, 4294901760
    %417 = vmatpush2.msra.mxu0 %v416
    %v418 = vand.u32 %v42, 4294901760
    %419 = vmatprep.mubr.f32.mxu0 %v418
    %v420 = vand.u32 %v41, 4294901760
    %421 = vmatmul.mubr.f32.gmra.mxu0 %v420
    %v422 = vpop.f32.mrf.mxu0
    %v423 = vadd.f32 %v191, %v422
    %v424 = vpop.f32.mrf.mxu0
    %425 = vdwg.mxu0
    %426 = vmatprep.subr.mxu0 0.0
    %v427 = vand.u32 %v58, 4294901760
    %v428 = vsub.f32 %v58, %v427
    %429 = vmatpush1.msra.mxu0 %v428
    %430 = vmatprep.subr.mxu0 0.0
    %v431 = vand.u32 %v57, 4294901760
    %v432 = vsub.f32 %v57, %v431
    %433 = vmatpush1.msra.mxu0 %v432
    %434 = vmatprep.subr.mxu0 0.0
    %v435 = vand.u32 %v56, 4294901760
    %v436 = vsub.f32 %v56, %v435
    %437 = vmatpush1.msra.mxu0 %v436
    %438 = vmatprep.subr.mxu0 0.0
    %v439 = vand.u32 %v55, 4294901760
    %v440 = vsub.f32 %v55, %v439
    %441 = vmatpush1.msra.mxu0 %v440
    %442 = vmatprep.subr.mxu0 0.0
    %v443 = vand.u32 %v54, 4294901760
    %v444 = vsub.f32 %v54, %v443
    %445 = vmatpush1.msra.mxu0 %v444
    %446 = vmatprep.subr.mxu0 0.0
    %v447 = vand.u32 %v53, 4294901760
    %v448 = vsub.f32 %v53, %v447
    %449 = vmatpush1.msra.mxu0 %v448
    %450 = vmatprep.subr.mxu0 0.0
    %v451 = vand.u32 %v52, 4294901760
    %v452 = vsub.f32 %v52, %v451
    %453 = vmatpush1.msra.mxu0 %v452
    %454 = vmatprep.subr.mxu0 0.0
    %v455 = vand.u32 %v51, 4294901760
    %v456 = vsub.f32 %v51, %v455
    %457 = vmatpush1.msra.mxu0 %v456
    %458 = vmatprep.subr.mxu0 0.0
    %v459 = vand.u32 %v50, 4294901760
    %v460 = vsub.f32 %v50, %v459
    %461 = vmatpush1.msra.mxu0 %v460
    %462 = vmatprep.subr.mxu0 0.0
    %v463 = vand.u32 %v49, 4294901760
    %v464 = vsub.f32 %v49, %v463
    %465 = vmatpush1.msra.mxu0 %v464
    %466 = vmatprep.subr.mxu0 0.0
    %v467 = vand.u32 %v48, 4294901760
    %v468 = vsub.f32 %v48, %v467
    %469 = vmatpush1.msra.mxu0 %v468
    %470 = vmatprep.subr.mxu0 0.0
    %v471 = vand.u32 %v47, 4294901760
    %v472 = vsub.f32 %v47, %v471
    %473 = vmatpush1.msra.mxu0 %v472
    %474 = vmatprep.subr.mxu0 0.0
    %v475 = vand.u32 %v46, 4294901760
    %v476 = vsub.f32 %v46, %v475
    %477 = vmatpush1.msra.mxu0 %v476
    %478 = vmatprep.subr.mxu0 0.0
    %v479 = vand.u32 %v45, 4294901760
    %v480 = vsub.f32 %v45, %v479
    %481 = vmatpush1.msra.mxu0 %v480
    %482 = vmatprep.subr.mxu0 0.0
    %v483 = vand.u32 %v44, 4294901760
    %v484 = vsub.f32 %v44, %v483
    %485 = vmatpush1.msra.mxu0 %v484
    %486 = vmatprep.subr.mxu0 0.0
    %v487 = vand.u32 %v43, 4294901760
    %v488 = vsub.f32 %v43, %v487
    %489 = vmatpush1.msra.mxu0 %v488
    %490 = vmatprep.subr.mxu0 0.0
    %v491 = vand.u32 %v74, 4294901760
    %v492 = vsub.f32 %v74, %v491
    %493 = vmatpush2.msra.mxu0 %v492
    %494 = vmatprep.subr.mxu0 0.0
    %v495 = vand.u32 %v73, 4294901760
    %v496 = vsub.f32 %v73, %v495
    %497 = vmatpush2.msra.mxu0 %v496
    %498 = vmatprep.subr.mxu0 0.0
    %v499 = vand.u32 %v72, 4294901760
    %v500 = vsub.f32 %v72, %v499
    %501 = vmatpush2.msra.mxu0 %v500
    %502 = vmatprep.subr.mxu0 0.0
    %v503 = vand.u32 %v71, 4294901760
    %v504 = vsub.f32 %v71, %v503
    %505 = vmatpush2.msra.mxu0 %v504
    %506 = vmatprep.subr.mxu0 0.0
    %v507 = vand.u32 %v70, 4294901760
    %v508 = vsub.f32 %v70, %v507
    %509 = vmatpush2.msra.mxu0 %v508
    %510 = vmatprep.subr.mxu0 0.0
    %v511 = vand.u32 %v69, 4294901760
    %v512 = vsub.f32 %v69, %v511
    %513 = vmatpush2.msra.mxu0 %v512
    %514 = vmatprep.subr.mxu0 0.0
    %v515 = vand.u32 %v68, 4294901760
    %v516 = vsub.f32 %v68, %v515
    %517 = vmatpush2.msra.mxu0 %v516
    %518 = vmatprep.subr.mxu0 0.0
    %v519 = vand.u32 %v67, 4294901760
    %v520 = vsub.f32 %v67, %v519
    %521 = vmatpush2.msra.mxu0 %v520
    %522 = vmatprep.subr.mxu0 0.0
    %v523 = vand.u32 %v66, 4294901760
    %v524 = vsub.f32 %v66, %v523
    %525 = vmatpush2.msra.mxu0 %v524
    %526 = vmatprep.subr.mxu0 0.0
    %v527 = vand.u32 %v65, 4294901760
    %v528 = vsub.f32 %v65, %v527
    %529 = vmatpush2.msra.mxu0 %v528
    %530 = vmatprep.subr.mxu0 0.0
    %v531 = vand.u32 %v64, 4294901760
    %v532 = vsub.f32 %v64, %v531
    %533 = vmatpush2.msra.mxu0 %v532
    %534 = vmatprep.subr.mxu0 0.0
    %v535 = vand.u32 %v63, 4294901760
    %v536 = vsub.f32 %v63, %v535
    %537 = vmatpush2.msra.mxu0 %v536
    %538 = vmatprep.subr.mxu0 0.0
    %v539 = vand.u32 %v62, 4294901760
    %v540 = vsub.f32 %v62, %v539
    %541 = vmatpush2.msra.mxu0 %v540
    %542 = vmatprep.subr.mxu0 0.0
    %v543 = vand.u32 %v61, 4294901760
    %v544 = vsub.f32 %v61, %v543
    %545 = vmatpush2.msra.mxu0 %v544
    %546 = vmatprep.subr.mxu0 0.0
    %v547 = vand.u32 %v60, 4294901760
    %v548 = vsub.f32 %v60, %v547
    %549 = vmatpush2.msra.mxu0 %v548
    %550 = vmatprep.subr.mxu0 0.0
    %v551 = vand.u32 %v59, 4294901760
    %v552 = vsub.f32 %v59, %v551
    %553 = vmatpush2.msra.mxu0 %v552
    %v554 = vand.u32 %v42, 4294901760
    %v555 = vsub.f32 %v42, %v554
    %556 = vmatprep.mubr.f32.mxu0 %v555
    %v557 = vand.u32 %v41, 4294901760
    %v558 = vsub.f32 %v41, %v557
    %559 = vmatmul.mubr.f32.gmra.mxu0 %v558
    %v560 = vpop.f32.mrf.mxu0
    %v561 = vadd.f32 %v423, %v560
    %v562 = vpop.f32.mrf.mxu0
    %563 = vdwg.mxu0
    %564 = vmatprep.subr.mxu0 0.0
    %v565 = vand.u32 %v58, 4294901760
    %566 = vmatpush1.msra.mxu0 %v565
    %567 = vmatprep.subr.mxu0 0.0
    %v568 = vand.u32 %v57, 4294901760
    %569 = vmatpush1.msra.mxu0 %v568
    %570 = vmatprep.subr.mxu0 0.0
    %v571 = vand.u32 %v56, 4294901760
    %572 = vmatpush1.msra.mxu0 %v571
    %573 = vmatprep.subr.mxu0 0.0
    %v574 = vand.u32 %v55, 4294901760
    %575 = vmatpush1.msra.mxu0 %v574
    %576 = vmatprep.subr.mxu0 0.0
    %v577 = vand.u32 %v54, 4294901760
    %578 = vmatpush1.msra.mxu0 %v577
    %579 = vmatprep.subr.mxu0 0.0
    %v580 = vand.u32 %v53, 4294901760
    %581 = vmatpush1.msra.mxu0 %v580
    %582 = vmatprep.subr.mxu0 0.0
    %v583 = vand.u32 %v52, 4294901760
    %584 = vmatpush1.msra.mxu0 %v583
    %585 = vmatprep.subr.mxu0 0.0
    %v586 = vand.u32 %v51, 4294901760
    %587 = vmatpush1.msra.mxu0 %v586
    %588 = vmatprep.subr.mxu0 0.0
    %v589 = vand.u32 %v50, 4294901760
    %590 = vmatpush1.msra.mxu0 %v589
    %591 = vmatprep.subr.mxu0 0.0
    %v592 = vand.u32 %v49, 4294901760
    %593 = vmatpush1.msra.mxu0 %v592
    %594 = vmatprep.subr.mxu0 0.0
    %v595 = vand.u32 %v48, 4294901760
    %596 = vmatpush1.msra.mxu0 %v595
    %597 = vmatprep.subr.mxu0 0.0
    %v598 = vand.u32 %v47, 4294901760
    %599 = vmatpush1.msra.mxu0 %v598
    %600 = vmatprep.subr.mxu0 0.0
    %v601 = vand.u32 %v46, 4294901760
    %602 = vmatpush1.msra.mxu0 %v601
    %603 = vmatprep.subr.mxu0 0.0
    %v604 = vand.u32 %v45, 4294901760
    %605 = vmatpush1.msra.mxu0 %v604
    %606 = vmatprep.subr.mxu0 0.0
    %v607 = vand.u32 %v44, 4294901760
    %608 = vmatpush1.msra.mxu0 %v607
    %609 = vmatprep.subr.mxu0 0.0
    %v610 = vand.u32 %v43, 4294901760
    %611 = vmatpush1.msra.mxu0 %v610
    %612 = vmatprep.subr.mxu0 0.0
    %v613 = vand.u32 %v74, 4294901760
    %614 = vmatpush2.msra.mxu0 %v613
    %615 = vmatprep.subr.mxu0 0.0
    %v616 = vand.u32 %v73, 4294901760
    %617 = vmatpush2.msra.mxu0 %v616
    %618 = vmatprep.subr.mxu0 0.0
    %v619 = vand.u32 %v72, 4294901760
    %620 = vmatpush2.msra.mxu0 %v619
    %621 = vmatprep.subr.mxu0 0.0
    %v622 = vand.u32 %v71, 4294901760
    %623 = vmatpush2.msra.mxu0 %v622
    %624 = vmatprep.subr.mxu0 0.0
    %v625 = vand.u32 %v70, 4294901760
    %626 = vmatpush2.msra.mxu0 %v625
    %627 = vmatprep.subr.mxu0 0.0
    %v628 = vand.u32 %v69, 4294901760
    %629 = vmatpush2.msra.mxu0 %v628
    %630 = vmatprep.subr.mxu0 0.0
    %v631 = vand.u32 %v68, 4294901760
    %632 = vmatpush2.msra.mxu0 %v631
    %633 = vmatprep.subr.mxu0 0.0
    %v634 = vand.u32 %v67, 4294901760
    %635 = vmatpush2.msra.mxu0 %v634
    %636 = vmatprep.subr.mxu0 0.0
    %v637 = vand.u32 %v66, 4294901760
    %638 = vmatpush2.msra.mxu0 %v637
    %639 = vmatprep.subr.mxu0 0.0
    %v640 = vand.u32 %v65, 4294901760
    %641 = vmatpush2.msra.mxu0 %v640
    %642 = vmatprep.subr.mxu0 0.0
    %v643 = vand.u32 %v64, 4294901760
    %644 = vmatpush2.msra.mxu0 %v643
    %645 = vmatprep.subr.mxu0 0.0
    %v646 = vand.u32 %v63, 4294901760
    %647 = vmatpush2.msra.mxu0 %v646
    %648 = vmatprep.subr.mxu0 0.0
    %v649 = vand.u32 %v62, 4294901760
    %650 = vmatpush2.msra.mxu0 %v649
    %651 = vmatprep.subr.mxu0 0.0
    %v652 = vand.u32 %v61, 4294901760
    %653 = vmatpush2.msra.mxu0 %v652
    %654 = vmatprep.subr.mxu0 0.0
    %v655 = vand.u32 %v60, 4294901760
    %656 = vmatpush2.msra.mxu0 %v655
    %657 = vmatprep.subr.mxu0 0.0
    %v658 = vand.u32 %v59, 4294901760
    %659 = vmatpush2.msra.mxu0 %v658
    %v660 = vand.u32 %v42, 4294901760
    %v661 = vsub.f32 %v42, %v660
    %v662 = vand.u32 %v661, 4294901760
    %663 = vmatprep.mubr.f32.mxu0 %v662
    %v664 = vand.u32 %v41, 4294901760
    %v665 = vsub.f32 %v41, %v664
    %v666 = vand.u32 %v665, 4294901760
    %667 = vmatmul.mubr.f32.gmra.mxu0 %v666
    %v668 = vpop.f32.mrf.mxu0
    %v669 = vadd.f32 %v561, %v668
    %v670 = vpop.f32.mrf.mxu0
    %671 = vdwg.mxu0
    %672 = vmatprep.subr.mxu0 0.0
    %v673 = vand.u32 %v58, 4294901760
    %v674 = vsub.f32 %v58, %v673
    %v675 = vand.u32 %v674, 4294901760
    %676 = vmatpush1.msra.mxu0 %v675
    %677 = vmatprep.subr.mxu0 0.0
    %v678 = vand.u32 %v57, 4294901760
    %v679 = vsub.f32 %v57, %v678
    %v680 = vand.u32 %v679, 4294901760
    %681 = vmatpush1.msra.mxu0 %v680
    %682 = vmatprep.subr.mxu0 0.0
    %v683 = vand.u32 %v56, 4294901760
    %v684 = vsub.f32 %v56, %v683
    %v685 = vand.u32 %v684, 4294901760
    %686 = vmatpush1.msra.mxu0 %v685
    %687 = vmatprep.subr.mxu0 0.0
    %v688 = vand.u32 %v55, 4294901760
    %v689 = vsub.f32 %v55, %v688
    %v690 = vand.u32 %v689, 4294901760
    %691 = vmatpush1.msra.mxu0 %v690
    %692 = vmatprep.subr.mxu0 0.0
    %v693 = vand.u32 %v54, 4294901760
    %v694 = vsub.f32 %v54, %v693
    %v695 = vand.u32 %v694, 4294901760
    %696 = vmatpush1.msra.mxu0 %v695
    %697 = vmatprep.subr.mxu0 0.0
    %v698 = vand.u32 %v53, 4294901760
    %v699 = vsub.f32 %v53, %v698
    %v700 = vand.u32 %v699, 4294901760
    %701 = vmatpush1.msra.mxu0 %v700
    %702 = vmatprep.subr.mxu0 0.0
    %v703 = vand.u32 %v52, 4294901760
    %v704 = vsub.f32 %v52, %v703
    %v705 = vand.u32 %v704, 4294901760
    %706 = vmatpush1.msra.mxu0 %v705
    %707 = vmatprep.subr.mxu0 0.0
    %v708 = vand.u32 %v51, 4294901760
    %v709 = vsub.f32 %v51, %v708
    %v710 = vand.u32 %v709, 4294901760
    %711 = vmatpush1.msra.mxu0 %v710
    %712 = vmatprep.subr.mxu0 0.0
    %v713 = vand.u32 %v50, 4294901760
    %v714 = vsub.f32 %v50, %v713
    %v715 = vand.u32 %v714, 4294901760
    %716 = vmatpush1.msra.mxu0 %v715
    %717 = vmatprep.subr.mxu0 0.0
    %v718 = vand.u32 %v49, 4294901760
    %v719 = vsub.f32 %v49, %v718
    %v720 = vand.u32 %v719, 4294901760
    %721 = vmatpush1.msra.mxu0 %v720
    %722 = vmatprep.subr.mxu0 0.0
    %v723 = vand.u32 %v48, 4294901760
    %v724 = vsub.f32 %v48, %v723
    %v725 = vand.u32 %v724, 4294901760
    %726 = vmatpush1.msra.mxu0 %v725
    %727 = vmatprep.subr.mxu0 0.0
    %v728 = vand.u32 %v47, 4294901760
    %v729 = vsub.f32 %v47, %v728
    %v730 = vand.u32 %v729, 4294901760
    %731 = vmatpush1.msra.mxu0 %v730
    %732 = vmatprep.subr.mxu0 0.0
    %v733 = vand.u32 %v46, 4294901760
    %v734 = vsub.f32 %v46, %v733
    %v735 = vand.u32 %v734, 4294901760
    %736 = vmatpush1.msra.mxu0 %v735
    %737 = vmatprep.subr.mxu0 0.0
    %v738 = vand.u32 %v45, 4294901760
    %v739 = vsub.f32 %v45, %v738
    %v740 = vand.u32 %v739, 4294901760
    %741 = vmatpush1.msra.mxu0 %v740
    %742 = vmatprep.subr.mxu0 0.0
    %v743 = vand.u32 %v44, 4294901760
    %v744 = vsub.f32 %v44, %v743
    %v745 = vand.u32 %v744, 4294901760
    %746 = vmatpush1.msra.mxu0 %v745
    %747 = vmatprep.subr.mxu0 0.0
    %v748 = vand.u32 %v43, 4294901760
    %v749 = vsub.f32 %v43, %v748
    %v750 = vand.u32 %v749, 4294901760
    %751 = vmatpush1.msra.mxu0 %v750
    %752 = vmatprep.subr.mxu0 0.0
    %v753 = vand.u32 %v74, 4294901760
    %v754 = vsub.f32 %v74, %v753
    %v755 = vand.u32 %v754, 4294901760
    %756 = vmatpush2.msra.mxu0 %v755
    %757 = vmatprep.subr.mxu0 0.0
    %v758 = vand.u32 %v73, 4294901760
    %v759 = vsub.f32 %v73, %v758
    %v760 = vand.u32 %v759, 4294901760
    %761 = vmatpush2.msra.mxu0 %v760
    %762 = vmatprep.subr.mxu0 0.0
    %v763 = vand.u32 %v72, 4294901760
    %v764 = vsub.f32 %v72, %v763
    %v765 = vand.u32 %v764, 4294901760
    %766 = vmatpush2.msra.mxu0 %v765
    %767 = vmatprep.subr.mxu0 0.0
    %v768 = vand.u32 %v71, 4294901760
    %v769 = vsub.f32 %v71, %v768
    %v770 = vand.u32 %v769, 4294901760
    %771 = vmatpush2.msra.mxu0 %v770
    %772 = vmatprep.subr.mxu0 0.0
    %v773 = vand.u32 %v70, 4294901760
    %v774 = vsub.f32 %v70, %v773
    %v775 = vand.u32 %v774, 4294901760
    %776 = vmatpush2.msra.mxu0 %v775
    %777 = vmatprep.subr.mxu0 0.0
    %v778 = vand.u32 %v69, 4294901760
    %v779 = vsub.f32 %v69, %v778
    %v780 = vand.u32 %v779, 4294901760
    %781 = vmatpush2.msra.mxu0 %v780
    %782 = vmatprep.subr.mxu0 0.0
    %v783 = vand.u32 %v68, 4294901760
    %v784 = vsub.f32 %v68, %v783
    %v785 = vand.u32 %v784, 4294901760
    %786 = vmatpush2.msra.mxu0 %v785
    %787 = vmatprep.subr.mxu0 0.0
    %v788 = vand.u32 %v67, 4294901760
    %v789 = vsub.f32 %v67, %v788
    %v790 = vand.u32 %v789, 4294901760
    %791 = vmatpush2.msra.mxu0 %v790
    %792 = vmatprep.subr.mxu0 0.0
    %v793 = vand.u32 %v66, 4294901760
    %v794 = vsub.f32 %v66, %v793
    %v795 = vand.u32 %v794, 4294901760
    %796 = vmatpush2.msra.mxu0 %v795
    %797 = vmatprep.subr.mxu0 0.0
    %v798 = vand.u32 %v65, 4294901760
    %v799 = vsub.f32 %v65, %v798
    %v800 = vand.u32 %v799, 4294901760
    %801 = vmatpush2.msra.mxu0 %v800
    %802 = vmatprep.subr.mxu0 0.0
    %v803 = vand.u32 %v64, 4294901760
    %v804 = vsub.f32 %v64, %v803
    %v805 = vand.u32 %v804, 4294901760
    %806 = vmatpush2.msra.mxu0 %v805
    %807 = vmatprep.subr.mxu0 0.0
    %v808 = vand.u32 %v63, 4294901760
    %v809 = vsub.f32 %v63, %v808
    %v810 = vand.u32 %v809, 4294901760
    %811 = vmatpush2.msra.mxu0 %v810
    %812 = vmatprep.subr.mxu0 0.0
    %v813 = vand.u32 %v62, 4294901760
    %v814 = vsub.f32 %v62, %v813
    %v815 = vand.u32 %v814, 4294901760
    %816 = vmatpush2.msra.mxu0 %v815
    %817 = vmatprep.subr.mxu0 0.0
    %v818 = vand.u32 %v61, 4294901760
    %v819 = vsub.f32 %v61, %v818
    %v820 = vand.u32 %v819, 4294901760
    %821 = vmatpush2.msra.mxu0 %v820
    %822 = vmatprep.subr.mxu0 0.0
    %v823 = vand.u32 %v60, 4294901760
    %v824 = vsub.f32 %v60, %v823
    %v825 = vand.u32 %v824, 4294901760
    %826 = vmatpush2.msra.mxu0 %v825
    %827 = vmatprep.subr.mxu0 0.0
    %v828 = vand.u32 %v59, 4294901760
    %v829 = vsub.f32 %v59, %v828
    %v830 = vand.u32 %v829, 4294901760
    %831 = vmatpush2.msra.mxu0 %v830
    %v832 = vand.u32 %v42, 4294901760
    %833 = vmatprep.mubr.f32.mxu0 %v832
    %v834 = vand.u32 %v41, 4294901760
    %835 = vmatmul.mubr.f32.gmra.mxu0 %v834
    %v836 = vpop.f32.mrf.mxu0
    %v837 = vadd.f32 %v669, %v836
    %v838 = vpop.f32.mrf.mxu0
    %839 = vdwg.mxu0
    %840 = vmatprep.subr.mxu0 0.0
    %v841 = vand.u32 %v58, 4294901760
    %842 = vmatpush1.msra.mxu0 %v841
    %843 = vmatprep.subr.mxu0 0.0
    %v844 = vand.u32 %v57, 4294901760
    %845 = vmatpush1.msra.mxu0 %v844
    %846 = vmatprep.subr.mxu0 0.0
    %v847 = vand.u32 %v56, 4294901760
    %848 = vmatpush1.msra.mxu0 %v847
    %849 = vmatprep.subr.mxu0 0.0
    %v850 = vand.u32 %v55, 4294901760
    %851 = vmatpush1.msra.mxu0 %v850
    %852 = vmatprep.subr.mxu0 0.0
    %v853 = vand.u32 %v54, 4294901760
    %854 = vmatpush1.msra.mxu0 %v853
    %855 = vmatprep.subr.mxu0 0.0
    %v856 = vand.u32 %v53, 4294901760
    %857 = vmatpush1.msra.mxu0 %v856
    %858 = vmatprep.subr.mxu0 0.0
    %v859 = vand.u32 %v52, 4294901760
    %860 = vmatpush1.msra.mxu0 %v859
    %861 = vmatprep.subr.mxu0 0.0
    %v862 = vand.u32 %v51, 4294901760
    %863 = vmatpush1.msra.mxu0 %v862
    %864 = vmatprep.subr.mxu0 0.0
    %v865 = vand.u32 %v50, 4294901760
    %866 = vmatpush1.msra.mxu0 %v865
    %867 = vmatprep.subr.mxu0 0.0
    %v868 = vand.u32 %v49, 4294901760
    %869 = vmatpush1.msra.mxu0 %v868
    %870 = vmatprep.subr.mxu0 0.0
    %v871 = vand.u32 %v48, 4294901760
    %872 = vmatpush1.msra.mxu0 %v871
    %873 = vmatprep.subr.mxu0 0.0
    %v874 = vand.u32 %v47, 4294901760
    %875 = vmatpush1.msra.mxu0 %v874
    %876 = vmatprep.subr.mxu0 0.0
    %v877 = vand.u32 %v46, 4294901760
    %878 = vmatpush1.msra.mxu0 %v877
    %879 = vmatprep.subr.mxu0 0.0
    %v880 = vand.u32 %v45, 4294901760
    %881 = vmatpush1.msra.mxu0 %v880
    %882 = vmatprep.subr.mxu0 0.0
    %v883 = vand.u32 %v44, 4294901760
    %884 = vmatpush1.msra.mxu0 %v883
    %885 = vmatprep.subr.mxu0 0.0
    %v886 = vand.u32 %v43, 4294901760
    %887 = vmatpush1.msra.mxu0 %v886
    %888 = vmatprep.subr.mxu0 0.0
    %v889 = vand.u32 %v74, 4294901760
    %890 = vmatpush2.msra.mxu0 %v889
    %891 = vmatprep.subr.mxu0 0.0
    %v892 = vand.u32 %v73, 4294901760
    %893 = vmatpush2.msra.mxu0 %v892
    %894 = vmatprep.subr.mxu0 0.0
    %v895 = vand.u32 %v72, 4294901760
    %896 = vmatpush2.msra.mxu0 %v895
    %897 = vmatprep.subr.mxu0 0.0
    %v898 = vand.u32 %v71, 4294901760
    %899 = vmatpush2.msra.mxu0 %v898
    %900 = vmatprep.subr.mxu0 0.0
    %v901 = vand.u32 %v70, 4294901760
    %902 = vmatpush2.msra.mxu0 %v901
    %903 = vmatprep.subr.mxu0 0.0
    %v904 = vand.u32 %v69, 4294901760
    %905 = vmatpush2.msra.mxu0 %v904
    %906 = vmatprep.subr.mxu0 0.0
    %v907 = vand.u32 %v68, 4294901760
    %908 = vmatpush2.msra.mxu0 %v907
    %909 = vmatprep.subr.mxu0 0.0
    %v910 = vand.u32 %v67, 4294901760
    %911 = vmatpush2.msra.mxu0 %v910
    %912 = vmatprep.subr.mxu0 0.0
    %v913 = vand.u32 %v66, 4294901760
    %914 = vmatpush2.msra.mxu0 %v913
    %915 = vmatprep.subr.mxu0 0.0
    %v916 = vand.u32 %v65, 4294901760
    %917 = vmatpush2.msra.mxu0 %v916
    %918 = vmatprep.subr.mxu0 0.0
    %v919 = vand.u32 %v64, 4294901760
    %920 = vmatpush2.msra.mxu0 %v919
    %921 = vmatprep.subr.mxu0 0.0
    %v922 = vand.u32 %v63, 4294901760
    %923 = vmatpush2.msra.mxu0 %v922
    %924 = vmatprep.subr.mxu0 0.0
    %v925 = vand.u32 %v62, 4294901760
    %926 = vmatpush2.msra.mxu0 %v925
    %927 = vmatprep.subr.mxu0 0.0
    %v928 = vand.u32 %v61, 4294901760
    %929 = vmatpush2.msra.mxu0 %v928
    %930 = vmatprep.subr.mxu0 0.0
    %v931 = vand.u32 %v60, 4294901760
    %932 = vmatpush2.msra.mxu0 %v931
    %933 = vmatprep.subr.mxu0 0.0
    %v934 = vand.u32 %v59, 4294901760
    %935 = vmatpush2.msra.mxu0 %v934
    %v936 = vand.u32 %v42, 4294901760
    %937 = vmatprep.mubr.f32.mxu0 %v936
    %v938 = vand.u32 %v41, 4294901760
    %939 = vmatmul.mubr.f32.gmra.mxu0 %v938
    %v940 = vpop.f32.mrf.mxu0
    %v941 = vadd.f32 %v837, %v940
    %v942 = vpop.f32.mrf.mxu0
    %943 = vdwg.mxu0
    %944 = vst [vmem:[#allocation7] sm:$0xff] %v941
    // Predicated region
    $region22: #{tpu_custom_call.1} parent=1 // pred_check
      _
    $region23: #{tpu_custom_call.1} parent=1 // pred_check_branch
      %946 = sbr.rel (0) target = $region25
    $region24: #{tpu_custom_call.1} parent=1 // pred_region
      %s948 = ssub.s32 128, 128
      %949 = vsyncadd [#allocation4], %s948
      %s951 = sshll.u32 [#allocation7], 4
      %s952 = int_to_ptr.vmem [resolvable:$true] %s951
      %954 = dma.vmem_to_hbm [thread:$0]  %s952, 128, %s3, [#allocation4]
    $region25: #{tpu_custom_call.1} parent=1 // pred_fallthru
      _
    // Predicated region
    $region26: #{tpu_custom_call.1} parent=1 // pred_check
      _
    $region27: #{tpu_custom_call.1} parent=1 // pred_check_branch
      %956 = sbr.rel (0) target = $region29
    $region28: #{tpu_custom_call.1} parent=1 // pred_region
      %957 = dma.done [#allocation4], 128
    $region29: #{tpu_custom_call.1} parent=1 // pred_fallthru
      _
    %958 = vsyncpa [#allocation3], 1
    %959 = vsyncpa [#allocation6], 1
    %960 = vsyncpa [#allocation4], 1

</llo_original>
